<compile_context>
chip_gen: v5e
topology: v5e:2x2
jax: 0.10.0
libtpu: 0.0.40
codegen_flags: <defaults>
</compile_context>

<pallas_src>
import functools

import jax
import jax.numpy as jnp
from jax.experimental import pallas as pl
from jax.experimental.pallas import tpu as pltpu


def _mapping_kernel(y_ref, w_ref, b_ref, out_ref, *, K):
    y = y_ref[...]                                           # [Bt, M]

    # Single fused affine for both heads on the MXU (f32 accumulation).
    z = jnp.dot(y, w_ref[...], preferred_element_type=jnp.float32)
    z = z + b_ref[...]                                       # [Bt, 2K] (+ [1, 2K] broadcast)

    # Numerically stable softplus (EUP exp/log1p; cheap).
    sp = jnp.maximum(z, 0.0) + jnp.log1p(jnp.exp(-jnp.abs(z)))

    # First K lanes -> identity (mu), last K lanes -> softplus (sigma).
    col = jax.lax.broadcasted_iota(jnp.int32, z.shape, dimension=1)
    out = jnp.where(col < K, z, sp)

    out_ref[...] = out.astype(out_ref.dtype)


def mapping_layer(y_p, w_mean, b_mean, w_std, b_std, *, batch_tile=512):
    """y_p: [B, M]; w_*: [M, K]; b_*: [K].  Returns (mu_post, sigma_post), both [B, K]."""
    B, M = y_p.shape
    K = w_mean.shape[1]
    K2 = 2 * K

    # Pack both heads into one weight / bias (fused MXU pass).
    w = jnp.concatenate([w_mean, w_std], axis=1)             # [M, 2K]
    b = jnp.concatenate([b_mean, b_std]).reshape(1, K2)      # [1, 2K]

    # Batch tiling: full array when small (no (8,128) constraint when block ==
    # full dim); otherwise a sublane-aligned tile with zero-padding to a multiple.
    if B <= batch_tile:
        tile, Bp, y = B, B, y_p
    else:
        tile = batch_tile                                    # multiple of 8
        Bp = ((B + tile - 1) // tile) * tile
        y = jnp.pad(y_p, ((0, Bp - B), (0, 0))) if Bp != B else y_p

    grid = (Bp // tile,)

    out = pl.pallas_call(
        functools.partial(_mapping_kernel, K=K),
        out_shape=jax.ShapeDtypeStruct((Bp, K2), y_p.dtype),
        grid_spec=pltpu.PrefetchScalarGridSpec(
            num_scalar_prefetch=0,
            grid=grid,
            in_specs=[
                pl.BlockSpec((tile, M), lambda i: (i, 0)),   # activations, tiled over batch
                pl.BlockSpec((M, K2), lambda i: (0, 0)),     # fused weights, VMEM-resident
                pl.BlockSpec((1, K2), lambda i: (0, 0)),     # fused bias, VMEM-resident
            ],
            out_specs=pl.BlockSpec((tile, K2), lambda i: (i, 0)),
        ),
        compiler_params=pltpu.CompilerParams(
            dimension_semantics=("parallel",),               # shards across TCs on v7x
        ),
    )(y, w, b)

    out = out[:B]
    return out[:, :K], out[:, K:]


def init_params(key, M, K, dtype=jnp.float32):
    """Deterministic init mirroring nn.Linear default: U(-1/sqrt(M), 1/sqrt(M))."""
    k1, k2, k3, k4 = jax.random.split(key, 4)
    bound = 1.0 / jnp.sqrt(jnp.asarray(M, dtype))
    # Stored already transposed to [M, K] (PyTorch keeps [K, M]).
    w_mean = jax.random.uniform(k1, (M, K), dtype, -bound, bound)
    b_mean = jax.random.uniform(k2, (K,), dtype, -bound, bound)
    w_std = jax.random.uniform(k3, (M, K), dtype, -bound, bound)
    b_std = jax.random.uniform(k4, (K,), dtype, -bound, bound)
    return w_mean, b_mean, w_std, b_std


def _reference(y_p, w_mean, b_mean, w_std, b_std):
    mu = y_p @ w_mean + b_mean
    sigma = jax.nn.softplus(y_p @ w_std + b_std)
    return mu, sigma


if __name__ == "__main__":
    M, K = 32, 16  # M portfolios -> K factors

    key = jax.random.PRNGKey(0)
    k_x, k_p, k_big = jax.random.split(key, 3)
    w_mean, b_mean, w_std, b_std = init_params(k_p, M, K)

    # Small case (single grid step, full-array blocks).
    B = 8
    y_p = jax.random.normal(k_x, (B, M), jnp.float32)
    mu_post, sigma_post = mapping_layer(y_p, w_mean, b_mean, w_std, b_std)
    jax.block_until_ready((mu_post, sigma_post))

    mu_ref, sigma_ref = _reference(y_p, w_mean, b_mean, w_std, b_std)
    assert mu_post.shape == (B, K) and sigma_post.shape == (B, K)
    assert jnp.allclose(mu_post, mu_ref, atol=1e-5, rtol=1e-5)
    assert jnp.allclose(sigma_post, sigma_ref, atol=1e-5, rtol=1e-5)
    assert bool(jnp.all(sigma_post > 0))

    # Batched case (exercises the batch grid with resident weights + padding).
    Bb = 1000
    y_big = jax.random.normal(k_big, (Bb, M), jnp.float32)
    mu_b, sigma_b = mapping_layer(y_big, w_mean, b_mean, w_std, b_std)
    jax.block_until_ready((mu_b, sigma_b))

    mu_br, sigma_br = _reference(y_big, w_mean, b_mean, w_std, b_std)
    assert mu_b.shape == (Bb, K) and sigma_b.shape == (Bb, K)
    assert jnp.allclose(mu_b, mu_br, atol=1e-5, rtol=1e-5)
    assert jnp.allclose(sigma_b, sigma_br, atol=1e-5, rtol=1e-5)
    assert bool(jnp.all(sigma_b > 0))

    print("KERNEL_OK")
</pallas_src>

<mosaic_0001>
module attributes {stable_mosaic.version = 11 : i64} {
  func.func @_mapping_kernel(%arg0: i32, %arg1: memref<8x32xf32, #tpu.memory_space<vmem>>, %arg2: memref<32x32xf32, #tpu.memory_space<vmem>>, %arg3: memref<1x32xf32, #tpu.memory_space<vmem>>, %arg4: memref<8x32xf32, #tpu.memory_space<vmem>>) attributes {dimension_semantics = [#tpu.dimension_semantics<parallel>], iteration_bounds = array<i64: 1>, scalar_prefetch = 0 : i64, scratch_operands = 0 : i64, tpu.core_type = #tpu.core_type<tc>, window_params = [{transform_indices = @transform_0, window_bounds = array<i64: 8, 32>}, {pipeline_mode = #tpu.pipeline_mode<synchronous>, transform_indices = @transform_1, window_bounds = array<i64: 32, 32>}, {pipeline_mode = #tpu.pipeline_mode<synchronous>, transform_indices = @transform_2, window_bounds = array<i64: 1, 32>}, {transform_indices = @transform_3, window_bounds = array<i64: 8, 32>}]} {
    %c0 = arith.constant 0 : index
    %c0_0 = arith.constant 0 : index
    %0 = vector.load %arg1[%c0, %c0_0] : memref<8x32xf32, #tpu.memory_space<vmem>>, vector<8x32xf32>
    %c0_1 = arith.constant 0 : index
    %c0_2 = arith.constant 0 : index
    %1 = vector.load %arg2[%c0_1, %c0_2] : memref<32x32xf32, #tpu.memory_space<vmem>>, vector<32x32xf32>
    %cst = arith.constant dense<0.000000e+00> : vector<8x32xf32>
    %2 = tpu.matmul %0, %1, %cst {dimension_numbers = #tpu.dot_dimension_numbers<[1], [0], [0], [1], [0, 0, 1, 1], [], []>} : vector<8x32xf32>, vector<32x32xf32>, vector<8x32xf32> -> vector<8x32xf32>
    %c0_3 = arith.constant 0 : index
    %c0_4 = arith.constant 0 : index
    %3 = vector.load %arg3[%c0_3, %c0_4] : memref<1x32xf32, #tpu.memory_space<vmem>>, vector<1x32xf32>
    %4 = vector.broadcast %3 : vector<1x32xf32> to vector<8x32xf32>
    %5 = arith.addf %2, %4 : vector<8x32xf32>
    %cst_5 = arith.constant 0.000000e+00 : f32
    %6 = vector.broadcast %cst_5 : f32 to vector<8x32xf32>
    %7 = arith.maximumf %5, %6 : vector<8x32xf32>
    %8 = math.absf %5 : vector<8x32xf32>
    %cst_6 = arith.constant 0.000000e+00 : f32
    %9 = vector.broadcast %cst_6 : f32 to vector<8x32xf32>
    %10 = arith.subf %9, %8 : vector<8x32xf32>
    %11 = math.exp %10 : vector<8x32xf32>
    %12 = math.log1p %11 : vector<8x32xf32>
    %13 = arith.addf %7, %12 : vector<8x32xf32>
    %14 = tpu.iota {dimensions = array<i32: 1>} : vector<8x32xi32>
    %c16_i32 = arith.constant 16 : i32
    %15 = vector.broadcast %c16_i32 : i32 to vector<8x32xi32>
    %16 = arith.cmpi slt, %14, %15 : vector<8x32xi32>
    %17 = arith.select %16, %5, %13 : vector<8x32xi1>, vector<8x32xf32>
    %c0_7 = arith.constant 0 : index
    %c0_8 = arith.constant 0 : index
    %18 = vector.load %arg4[%c0_7, %c0_8] : memref<8x32xf32, #tpu.memory_space<vmem>>, vector<8x32xf32>
    tpu.vector_store %arg4[%c0_7, %c0_8], %17 {strides = array<i32>} : memref<8x32xf32, #tpu.memory_space<vmem>>, vector<8x32xf32>,
    return
  }
  func.func @transform_0(%arg0: i32) -> (i32, i32) {
    %c0_i32 = arith.constant 0 : i32
    %c0_i32_0 = arith.constant 0 : i32
    return %arg0, %c0_i32 : i32, i32
  }
  func.func @transform_1(%arg0: i32) -> (i32, i32) {
    %c0_i32 = arith.constant 0 : i32
    %c0_i32_0 = arith.constant 0 : i32
    %c0_i32_1 = arith.constant 0 : i32
    return %c0_i32, %c0_i32_0 : i32, i32
  }
  func.func @transform_2(%arg0: i32) -> (i32, i32) {
    %c0_i32 = arith.constant 0 : i32
    %c0_i32_0 = arith.constant 0 : i32
    %c0_i32_1 = arith.constant 0 : i32
    return %c0_i32, %c0_i32_0 : i32, i32
  }
  func.func @transform_3(%arg0: i32) -> (i32, i32) {
    %c0_i32 = arith.constant 0 : i32
    %c0_i32_0 = arith.constant 0 : i32
    return %arg0, %c0_i32 : i32, i32
  }
}

</mosaic_0001>

<llo_original>
// kernel: tpu_custom_call.1
$region0: #{tpu_custom_call.1}
  #allocation0 [shape = 'u32[]', space=smem, size = 0x4, offset = 0x4, fixed_abs, tag = 'smem constant byte address 0x4 - core index']
  #allocation1 [shape = 'u32[72,128]{1,0:T(1,128)}', space=vmem, size = 0x9000, scoped, tag = 'internal scratch']
  %s0 = inlined_call_operand.hbm [shape: f32[8,32], index: 0, kind: input, shape index: {}]
  %s1 = inlined_call_operand.hbm [shape: f32[32,32], index: 1, kind: input, shape index: {}]
  %s2 = inlined_call_operand.vmem [shape: f32[1,32], index: 2, kind: input, shape index: {}]
  %s3 = inlined_call_operand.hbm [shape: f32[8,32], index: 3, kind: output, shape index: {}]
  %s4 = sld [smem:[#allocation0]]
  $region30: #{tpu_custom_call.1} parent=0
    _
  %s6 = ssub.s32 1, %s4
  %s7 = scalar_select 0, %s6, %s4
  $region1: #{tpu_custom_call.1} parent=0
    #allocation2 [shape = 'u8[4096]{0}', space=vmem, size = 0x1000, scoped, tag = 'input window, operand 0, single buffered']
    #allocation3 [shape = 's32[1]{0}', space=sflag, size = 0x4, scoped, tag = 'scoped memory for tpu_custom_call.1']
    #allocation4 [shape = 's32[1]{0}', space=sflag, size = 0x4, scoped, tag = 'scoped memory for tpu_custom_call.1']
    #allocation5 [shape = 'u8[16384]{0}', space=vmem, size = 0x4000, scoped, tag = 'input window, operand 1, single buffered']
    #allocation6 [shape = 's32[1]{0}', space=sflag, size = 0x4, scoped, tag = 'scoped memory for tpu_custom_call.1']
    #allocation7 [shape = 'u8[4096]{0}', space=vmem, size = 0x1000, scoped, tag = 'output window, operand 0, single buffered']
    %8 = vsyncpa [#allocation3], 0
    %9 = vsyncpa [#allocation6], 0
    %10 = vsyncpa [#allocation4], 0
    // Predicated region
    $region2: #{tpu_custom_call.1} parent=1 // pred_check
      _
    $region3: #{tpu_custom_call.1} parent=1 // pred_check_branch
      %12 = sbr.rel (0) target = $region5
    $region4: #{tpu_custom_call.1} parent=1 // pred_region
      %14 = vsyncadd [#allocation3], 0
      %s16 = sshll.u32 %s0, 4
      %s17 = int_to_ptr.hbm [resolvable:$true] %s16
      %s18 = sshll.u32 [#allocation2], 4
      %s19 = int_to_ptr.vmem [resolvable:$true] %s18
      %21 = dma.hbm_to_vmem [thread:$0]  %s17, 128, %s19, [#allocation3]
    $region5: #{tpu_custom_call.1} parent=1 // pred_fallthru
      _
    // Predicated region
    $region6: #{tpu_custom_call.1} parent=1 // pred_check
      _
    $region7: #{tpu_custom_call.1} parent=1 // pred_check_branch
      %23 = sbr.rel (0) target = $region9
    $region8: #{tpu_custom_call.1} parent=1 // pred_region
      %25 = vsyncadd [#allocation6], 0
      %s26 = sshll.u32 %s1, 4
      %s27 = int_to_ptr.hbm [resolvable:$true] %s26
      %s28 = sshll.u32 [#allocation5], 4
      %s29 = int_to_ptr.vmem [resolvable:$true] %s28
      %34 = dma.hbm_to_vmem [thread:$0]  %s27, 512, %s29, [#allocation6], 128, 128, 8
    $region9: #{tpu_custom_call.1} parent=1 // pred_fallthru
      _
    // Predicated region
    $region10: #{tpu_custom_call.1} parent=1 // pred_check
      _
    $region11: #{tpu_custom_call.1} parent=1 // pred_check_branch
      %36 = sbr.rel (0) target = $region13
    $region12: #{tpu_custom_call.1} parent=1 // pred_region
      _
    $region13: #{tpu_custom_call.1} parent=1 // pred_fallthru
      _
    // Predicated region
    $region14: #{tpu_custom_call.1} parent=1 // pred_check
      _
    $region15: #{tpu_custom_call.1} parent=1 // pred_check_branch
      %38 = sbr.rel (0) target = $region17
    $region16: #{tpu_custom_call.1} parent=1 // pred_region
      %40 = dma.done [#allocation3], 128
    $region17: #{tpu_custom_call.1} parent=1 // pred_fallthru
      _
    // Predicated region
    $region18: #{tpu_custom_call.1} parent=1 // pred_check
      _
    $region19: #{tpu_custom_call.1} parent=1 // pred_check_branch
      %42 = sbr.rel (0) target = $region21
    $region20: #{tpu_custom_call.1} parent=1 // pred_region
      %44 = dma.done [#allocation6], 512
    $region21: #{tpu_custom_call.1} parent=1 // pred_fallthru
      _
    %v45 = vld [vmem:[#allocation2] sm:$0xff]
    %v46 = vld [vmem:[#allocation5] sm:$0xff]
    %v47 = vld [vmem:[#allocation5 + $0x8] sm:$0xff]
    %v48 = vld [vmem:[#allocation5 + $0x10] sm:$0xff]
    %v49 = vld [vmem:[#allocation5 + $0x18] sm:$0xff]
    %v50 = vld [vmem:[%s2] sm:$0x1]
    %v52 = vperm.slane %v50, 0
    %vm54 = vcmask 261120
    %v56 = vsel %vm54, %v45, 0
    %58 = vmatpush.msra.mxu0 0.0
    %59 = vmatpush.msra.mxu0 0.0
    %60 = vmatpush.msra.mxu0 0.0
    %61 = vmatpush.msra.mxu0 0.0
    %62 = vmatpush.msra.mxu0 0.0
    %63 = vmatpush.msra.mxu0 0.0
    %64 = vmatpush.msra.mxu0 0.0
    %65 = vmatpush.msra.mxu0 0.0
    %66 = vmatpush.msra.mxu0 0.0
    %67 = vmatpush.msra.mxu0 0.0
    %68 = vmatpush.msra.mxu0 0.0
    %69 = vmatpush.msra.mxu0 0.0
    %70 = vmatpush.msra.mxu0 %v49
    %71 = vmatpush.msra.mxu0 %v48
    %72 = vmatpush.msra.mxu0 %v47
    %73 = vmatpush.msra.mxu0 %v46
    %74 = vmatmul.f32.gmra.mxu0 %v56
    %v75 = vpop.f32.mrf.mxu0
    %v76 = vadd.f32 %v52, %v75
    %77 = vdwg.mxu0
    %v78 = vmax.f32 %v76, 0.0
    %v79 = vand.u32 2147483647, %v76
    %v80 = vsub.f32 0.0, %v79
    %v81 = vmul.f32 %v80, 1.442695
    %v82 = vpow.pop %v81
    %v83 = vadd.f32 %v82, 1.0
    %v84 = vlog2.pop %v83
    %v85 = vmul.f32 %v84, 0.6931472
    %v86 = vmul.f32 -0.5, %v82
    %v87 = vadd.f32 %v86, 1.0
    %v88 = vmul.f32 %v87, %v82
    %v89 = vand.u32 2147483647, %v82
    %vm90 = vcmp.lt.f32.partialorder %v89, 0.0004427343
    %v91 = vsel %vm90, %v88, %v85
    %v92 = vadd.f32 %v78, %v91
    %v93 = vlaneseq
    %v94 = vand.u32 %v93, 127
    %vm95 = vcmp.lt.s32.totalorder %v94, 16
    %v96 = vsel %vm95, %v76, %v92
    %97 = vst.msk [vmem:[#allocation7] sm:$0xff] %vm54, %v96
    // Predicated region
    $region22: #{tpu_custom_call.1} parent=1 // pred_check
      _
    $region23: #{tpu_custom_call.1} parent=1 // pred_check_branch
      %99 = sbr.rel (0) target = $region25
    $region24: #{tpu_custom_call.1} parent=1 // pred_region
      %101 = vsyncadd [#allocation4], 0
      %s103 = sshll.u32 [#allocation7], 4
      %s104 = int_to_ptr.vmem [resolvable:$true] %s103
      %s105 = sshll.u32 %s3, 4
      %s106 = int_to_ptr.hbm [resolvable:$true] %s105
      %108 = dma.vmem_to_hbm [thread:$0]  %s104, 128, %s106, [#allocation4]
    $region25: #{tpu_custom_call.1} parent=1 // pred_fallthru
      _
    // Predicated region
    $region26: #{tpu_custom_call.1} parent=1 // pred_check
      _
    $region27: #{tpu_custom_call.1} parent=1 // pred_check_branch
      %110 = sbr.rel (0) target = $region29
    $region28: #{tpu_custom_call.1} parent=1 // pred_region
      %112 = dma.done [#allocation4], 128
    $region29: #{tpu_custom_call.1} parent=1 // pred_fallthru
      _
    %113 = vsyncpa [#allocation3], 1
    %114 = vsyncpa [#allocation6], 1
    %115 = vsyncpa [#allocation4], 1

</llo_original>
